<compile_context>
chip_gen: v7x
topology: tpu7x:2x2x1
jax: 0.10.0
libtpu: 0.0.40
codegen_flags: <defaults>
</compile_context>

<pallas_src>
import functools

import jax
import jax.numpy as jnp
from jax import lax
from jax.experimental import pallas as pl
from jax.experimental.pallas import tpu as pltpu


def _round_up(v, m):
    return (v + m - 1) // m * m


def _godin_tile_kernel(x_ref, wn_ref, invd_ref, out_ref, *, clampval):
    # x tile: (TB, F); wn tile: (TC, F) already row-normalized; invd tile: (TB, 1)
    x = x_ref[...].astype(jnp.float32)
    row_norm = jnp.sqrt(jnp.sum(x * x, axis=-1, keepdims=True))        # (TB, 1)
    x_n = x * (1.0 / (row_norm + 1e-4))                                # (TB, F)

    # Cosine-style logits on the MXU: contract last axis of both operands,
    # no explicit transpose of the weight tile.
    numerators = lax.dot_general(
        x_n.astype(wn_ref.dtype), wn_ref[...],
        dimension_numbers=(((1,), (1,)), ((), ())),
        preferred_element_type=jnp.float32)                            # (TB, TC)

    q = numerators * invd_ref[...].astype(jnp.float32)                 # broadcast (TB, 1)
    q = jnp.clip(q, -clampval, clampval)

    # PyTorch Softplus (beta=1, threshold=20): linear above the threshold.
    sp = jnp.log1p(jnp.exp(jnp.minimum(q, 20.0)))
    out_ref[...] = jnp.where(q > 20.0, q, sp)


def godin_layer_softplus(x, h_weight, g_weight, g_bias, bn_gamma, bn_beta,
                         clampval=50.0):
    B, F = x.shape
    C = h_weight.shape[0]
    f32 = jnp.float32
    xf = x.astype(f32)

    # ---- g branch: Linear(F,1) -> BatchNorm1d(1) (training/batch stats) -> Sigmoid ----
    # Batch statistics reduce over the *entire* batch, so they must stay outside the
    # batch-tiled kernel; they are negligible-cost standalone XLA ops.
    g_lin = xf @ g_weight.astype(f32).reshape(F, 1) + g_bias.astype(f32).reshape(1, 1)
    bn_mean = jnp.mean(g_lin)
    bn_var = jnp.mean(jnp.square(g_lin - bn_mean))                     # biased var (training)
    g_bn = (g_lin - bn_mean) * lax.rsqrt(bn_var + 1e-5)
    g_bn = g_bn * bn_gamma.astype(f32).reshape(1, 1) + bn_beta.astype(f32).reshape(1, 1)
    denominators = jax.nn.sigmoid(g_bn)                                # stable sigmoid, (B, 1)
    inv_den = (1.0 / denominators).astype(f32)                         # kernel multiplies, no divide

    # ---- normalize h.weight once (O(C*F)); keep per-tile kernel work O(tile) ----
    whf = h_weight.astype(f32)
    w_n = whf / (jnp.sqrt(jnp.sum(whf * whf, axis=-1, keepdims=True)) + 1e-4)
    w_n = w_n.astype(h_weight.dtype)   # bf16 weights feed the MXU at native rate

    # ---- tile sizes ----
    TC = 128 if C <= 128 else 256                     # lane-dense output tiles
    Cp = _round_up(C, TC)
    x_item = jnp.dtype(x.dtype).itemsize
    w_item = jnp.dtype(w_n.dtype).itemsize

    def _tile_bytes(tb):
        in_b = tb * F * x_item + TC * F * w_item + tb * 4
        out_b = tb * TC * 4
        return 2 * (in_b + out_b)                     # double-buffered by the pipeline

    TB = 512
    while TB > 8 and _tile_bytes(TB) > 24 * 1024 * 1024:
        TB //= 2
    TB = min(TB, _round_up(B, 8))                     # both multiples of 8
    Bp = _round_up(B, TB)

    # ---- pad to tile boundaries (padding sliced off below) ----
    x_p = jnp.zeros((Bp, F), x.dtype).at[:B, :].set(x)
    w_p = jnp.zeros((Cp, F), w_n.dtype).at[:C, :].set(w_n)
    inv_p = jnp.ones((Bp, 1), f32).at[:B, :].set(inv_den)

    kernel = functools.partial(_godin_tile_kernel, clampval=float(clampval))
    grid = (Bp // TB, Cp // TC)

    out_p = pl.pallas_call(
        kernel,
        out_shape=jax.ShapeDtypeStruct((Bp, Cp), jnp.float32),
        grid=grid,
        in_specs=[
            pl.BlockSpec((TB, F), lambda i, j: (i, 0)),   # x tile (stays resident across j)
            pl.BlockSpec((TC, F), lambda i, j: (j, 0)),   # normalized h.weight tile
            pl.BlockSpec((TB, 1), lambda i, j: (i, 0)),   # 1 / denominator
        ],
        out_specs=pl.BlockSpec((TB, TC), lambda i, j: (i, j)),
        compiler_params=pltpu.CompilerParams(
            dimension_semantics=("parallel", "parallel"),
            vmem_limit_bytes=32 * 1024 * 1024),
    )(x_p, w_p, inv_p)

    # TODO(synk): eval-mode forward returns the raw tuple (quotients, numerators,
    # denominators) and uses BN running stats; only the training path is implemented.
    return out_p[:B, :C]


def _reference(x, h_weight, g_weight, g_bias, bn_gamma, bn_beta, clampval=50.0):
    g_lin = x @ g_weight.T + g_bias                      # (B, 1)
    mean = jnp.mean(g_lin)
    var = jnp.mean((g_lin - mean) ** 2)
    g_bn = (g_lin - mean) / jnp.sqrt(var + 1e-5) * bn_gamma + bn_beta
    den = jax.nn.sigmoid(g_bn)
    xn = x / (jnp.linalg.norm(x, axis=1, keepdims=True) + 1e-4)
    wn = h_weight / (jnp.linalg.norm(h_weight, axis=1, keepdims=True) + 1e-4)
    q = jnp.clip((xn @ wn.T) / den, -clampval, clampval)
    return jnp.where(q > 20.0, q, jnp.log1p(jnp.exp(jnp.minimum(q, 20.0))))


if __name__ == "__main__":
    B, F, C = 8, 32, 16   # batch, in_features, num_classes

    key = jax.random.PRNGKey(0)
    kx, kh, kgw, kgb = jax.random.split(key, 4)

    x = jax.random.normal(kx, (B, F), dtype=jnp.float32)

    # h.weight: kaiming_normal_(nonlinearity='relu', mode='fan_in') -> std = sqrt(2 / F)
    h_weight = jax.random.normal(kh, (C, F), dtype=jnp.float32) * jnp.sqrt(2.0 / F)
    # g Linear(F, 1): default PyTorch init U(-1/sqrt(F), 1/sqrt(F))
    bound = 1.0 / jnp.sqrt(float(F))
    g_weight = jax.random.uniform(kgw, (1, F), jnp.float32, -bound, bound)
    g_bias = jax.random.uniform(kgb, (1,), jnp.float32, -bound, bound)
    # BatchNorm1d(1) affine params (default init)
    bn_gamma = jnp.ones((1,), jnp.float32)
    bn_beta = jnp.zeros((1,), jnp.float32)

    out = godin_layer_softplus(x, h_weight, g_weight, g_bias, bn_gamma, bn_beta)
    out = jax.block_until_ready(out)

    ref = _reference(x, h_weight, g_weight, g_bias, bn_gamma, bn_beta)
    assert out.shape == (B, C) and out.dtype == jnp.float32
    assert jnp.allclose(out, ref, atol=1e-4, rtol=1e-4), "mismatch vs JAX reference"

    print("KERNEL_OK")
</pallas_src>

<mosaic_0001>
module attributes {stable_mosaic.version = 11 : i64} {
  func.func @_godin_tile_kernel(%arg0: i32, %arg1: i32, %arg2: memref<8x32xf32, #tpu.memory_space<vmem>>, %arg3: memref<128x32xf32, #tpu.memory_space<vmem>>, %arg4: memref<8x1xf32, #tpu.memory_space<vmem>>, %arg5: memref<8x128xf32, #tpu.memory_space<vmem>>) attributes {dimension_semantics = [#tpu.dimension_semantics<parallel>, #tpu.dimension_semantics<parallel>], iteration_bounds = array<i64: 1, 1>, scalar_prefetch = 0 : i64, scratch_operands = 0 : i64, tpu.core_type = #tpu.core_type<tc>, window_params = [{transform_indices = @transform_0, window_bounds = array<i64: 8, 32>}, {transform_indices = @transform_1, window_bounds = array<i64: 128, 32>}, {transform_indices = @transform_2, window_bounds = array<i64: 8, 1>}, {transform_indices = @transform_3, window_bounds = array<i64: 8, 128>}]} {
    %c0 = arith.constant 0 : index
    %c0_0 = arith.constant 0 : index
    %0 = vector.load %arg2[%c0, %c0_0] : memref<8x32xf32, #tpu.memory_space<vmem>>, vector<8x32xf32>
    %1 = arith.mulf %0, %0 : vector<8x32xf32>
    %cst = arith.constant dense<0.000000e+00> : vector<8xf32>
    %2 = vector.multi_reduction <add>, %1, %cst [1] : vector<8x32xf32> to vector<8xf32>
    %3 = vector.shape_cast %2 : vector<8xf32> to vector<8x1xf32>
    %4 = math.sqrt %3 : vector<8x1xf32>
    %cst_1 = arith.constant 9.99999974E-5 : f32
    %5 = vector.broadcast %cst_1 : f32 to vector<8x1xf32>
    %6 = arith.addf %4, %5 : vector<8x1xf32>
    %cst_2 = arith.constant 1.000000e+00 : f32
    %7 = vector.broadcast %cst_2 : f32 to vector<8x1xf32>
    %8 = arith.divf %7, %6 : vector<8x1xf32>
    %9 = vector.broadcast %8 : vector<8x1xf32> to vector<8x32xf32>
    %10 = arith.mulf %0, %9 : vector<8x32xf32>
    %c0_3 = arith.constant 0 : index
    %c0_4 = arith.constant 0 : index
    %11 = vector.load %arg3[%c0_3, %c0_4] : memref<128x32xf32, #tpu.memory_space<vmem>>, vector<128x32xf32>
    %cst_5 = arith.constant dense<0.000000e+00> : vector<8x128xf32>
    %12 = tpu.matmul %10, %11, %cst_5 {dimension_numbers = #tpu.dot_dimension_numbers<[1], [1], [0], [0], [0, 0, 1, 0], [], []>} : vector<8x32xf32>, vector<128x32xf32>, vector<8x128xf32> -> vector<8x128xf32>
    %c0_6 = arith.constant 0 : index
    %c0_7 = arith.constant 0 : index
    %13 = vector.load %arg4[%c0_6, %c0_7] : memref<8x1xf32, #tpu.memory_space<vmem>>, vector<8x1xf32>
    %14 = vector.broadcast %13 : vector<8x1xf32> to vector<8x128xf32>
    %15 = arith.mulf %12, %14 : vector<8x128xf32>
    %cst_8 = arith.constant -5.000000e+01 : f32
    %cst_9 = arith.constant 5.000000e+01 : f32
    %16 = vector.broadcast %cst_8 : f32 to vector<8x128xf32>
    %17 = arith.maximumf %16, %15 : vector<8x128xf32>
    %18 = vector.broadcast %cst_9 : f32 to vector<8x128xf32>
    %19 = arith.minimumf %18, %17 : vector<8x128xf32>
    %cst_10 = arith.constant 2.000000e+01 : f32
    %20 = vector.broadcast %cst_10 : f32 to vector<8x128xf32>
    %21 = arith.minimumf %19, %20 : vector<8x128xf32>
    %22 = math.exp %21 : vector<8x128xf32>
    %23 = math.log1p %22 : vector<8x128xf32>
    %cst_11 = arith.constant 2.000000e+01 : f32
    %24 = vector.broadcast %cst_11 : f32 to vector<8x128xf32>
    %25 = arith.cmpf ogt, %19, %24 : vector<8x128xf32>
    %26 = arith.select %25, %19, %23 : vector<8x128xi1>, vector<8x128xf32>
    %c0_12 = arith.constant 0 : index
    %c0_13 = arith.constant 0 : index
    %27 = vector.load %arg5[%c0_12, %c0_13] : memref<8x128xf32, #tpu.memory_space<vmem>>, vector<8x128xf32>
    tpu.vector_store %arg5[%c0_12, %c0_13], %26 {strides = array<i32>} : memref<8x128xf32, #tpu.memory_space<vmem>>, vector<8x128xf32>,
    return
  }
  func.func @transform_0(%arg0: i32, %arg1: i32) -> (i32, i32) {
    %c0_i32 = arith.constant 0 : i32
    %c0_i32_0 = arith.constant 0 : i32
    return %arg0, %c0_i32 : i32, i32
  }
  func.func @transform_1(%arg0: i32, %arg1: i32) -> (i32, i32) {
    %c0_i32 = arith.constant 0 : i32
    %c0_i32_0 = arith.constant 0 : i32
    return %arg1, %c0_i32 : i32, i32
  }
  func.func @transform_2(%arg0: i32, %arg1: i32) -> (i32, i32) {
    %c0_i32 = arith.constant 0 : i32
    %c0_i32_0 = arith.constant 0 : i32
    return %arg0, %c0_i32 : i32, i32
  }
  func.func @transform_3(%arg0: i32, %arg1: i32) -> (i32, i32) {
    %c0_i32 = arith.constant 0 : i32
    return %arg0, %arg1 : i32, i32
  }
}

</mosaic_0001>

<llo_original>
// kernel: tpu_custom_call.1
$region0: #{tpu_custom_call.1}
  #allocation0 [shape = 'u32[]', space=smem, size = 0x4, offset = 0x4, fixed_abs, tag = 'smem constant byte address 0x4 - core index']
  #allocation1 [shape = 'u32[144,128]{1,0:T(1,128)}', space=vmem, size = 0x12000, scoped, tag = 'internal scratch']
  %s0 = inlined_call_operand.vmem [shape: f32[8,32], index: 0, kind: input, shape index: {}]
  %s1 = inlined_call_operand.vmem [shape: f32[128,32], index: 1, kind: input, shape index: {}]
  %s2 = inlined_call_operand.vmem [shape: f32[8,1], index: 2, kind: input, shape index: {}]
  %s3 = inlined_call_operand.hbm [shape: f32[8,128], index: 3, kind: output, shape index: {}]
  %s4 = sld [smem:[#allocation0]]
  $region22: #{tpu_custom_call.1} parent=0
    _
  %s6 = ssub.s32 1, %s4
  %s7 = scalar_select 0, %s6, %s4
  $region1: #{tpu_custom_call.1} parent=0
    #allocation2 [shape = 'u8[4096]{0}', space=vmem, size = 0x1000, scoped, tag = 'output window, operand 0, single buffered']
    #allocation3 [shape = 's32[1]{0}', space=sflag, size = 0x4, scoped, tag = 'scoped memory for tpu_custom_call.1']
    %8 = vsyncpa [#allocation3], 0
    // Predicated region
    $region2: #{tpu_custom_call.1} parent=1 // pred_check
      _
    $region3: #{tpu_custom_call.1} parent=1 // pred_check_branch
      %10 = sbr.rel (0) target = $region5
    $region4: #{tpu_custom_call.1} parent=1 // pred_region
      _
    $region5: #{tpu_custom_call.1} parent=1 // pred_fallthru
      _
    // Predicated region
    $region6: #{tpu_custom_call.1} parent=1 // pred_check
      _
    $region7: #{tpu_custom_call.1} parent=1 // pred_check_branch
      %12 = sbr.rel (0) target = $region9
    $region8: #{tpu_custom_call.1} parent=1 // pred_region
      _
    $region9: #{tpu_custom_call.1} parent=1 // pred_fallthru
      _
    // Predicated region
    $region10: #{tpu_custom_call.1} parent=1 // pred_check
      _
    $region11: #{tpu_custom_call.1} parent=1 // pred_check_branch
      %14 = sbr.rel (0) target = $region13
    $region12: #{tpu_custom_call.1} parent=1 // pred_region
      _
    $region13: #{tpu_custom_call.1} parent=1 // pred_fallthru
      _
    %v15 = vld [vmem:[%s0] sm:$0xff]
    %v16 = vmul.f32 %v15, %v15
    %vm17 = vcmask 261120
    %v18 = vsel %vm17, %v16, 0.0
    %19 = vadd.xlane.f32.xlu0 %v18
    %v20 = vpop.xlane.xlu0 %19
    %v21 = vrsqrt.pop %v20
    %v22 = vmul.f32 %v20, %v21
    %vm23 = vcmp.eq.f32.partialorder %v20, inf
    %v24 = vsel %vm23, %v20, %v22
    %vm25 = vcmp.eq.f32.partialorder %v20, 0.0
    %v26 = vand.u32 %v20, 2147483648
    %v27 = vsel %vm25, %v26, %v24
    %v28 = vadd.f32 %v27, 0.0001
    %v29 = vrcp.pop %v28
    %v30 = vmul.f32 1.0, %v29
    %v31 = vmul.f32 %v15, %v30
    %v32 = vld [vmem:[%s1] sm:$0xff]
    %v33 = vld [vmem:[%s1 + $0x8] sm:$0xff]
    %v34 = vld [vmem:[%s1 + $0x10] sm:$0xff]
    %v35 = vld [vmem:[%s1 + $0x18] sm:$0xff]
    %v36 = vld [vmem:[%s1 + $0x20] sm:$0xff]
    %v37 = vld [vmem:[%s1 + $0x28] sm:$0xff]
    %v38 = vld [vmem:[%s1 + $0x30] sm:$0xff]
    %v39 = vld [vmem:[%s1 + $0x38] sm:$0xff]
    %v40 = vld [vmem:[%s1 + $0x40] sm:$0xff]
    %v41 = vld [vmem:[%s1 + $0x48] sm:$0xff]
    %v42 = vld [vmem:[%s1 + $0x50] sm:$0xff]
    %v43 = vld [vmem:[%s1 + $0x58] sm:$0xff]
    %v44 = vld [vmem:[%s1 + $0x60] sm:$0xff]
    %v45 = vld [vmem:[%s1 + $0x68] sm:$0xff]
    %v46 = vld [vmem:[%s1 + $0x70] sm:$0xff]
    %v47 = vld [vmem:[%s1 + $0x78] sm:$0xff]
    %v49 = vsel %vm17, %v31, 0
    %v52 = vsel %vm17, %v32, 0
    %v55 = vsel %vm17, %v33, 0
    %v58 = vsel %vm17, %v34, 0
    %v61 = vsel %vm17, %v35, 0
    %v64 = vsel %vm17, %v36, 0
    %v67 = vsel %vm17, %v37, 0
    %v70 = vsel %vm17, %v38, 0
    %v73 = vsel %vm17, %v39, 0
    %v76 = vsel %vm17, %v40, 0
    %v79 = vsel %vm17, %v41, 0
    %v82 = vsel %vm17, %v42, 0
    %v85 = vsel %vm17, %v43, 0
    %v88 = vsel %vm17, %v44, 0
    %v91 = vsel %vm17, %v45, 0
    %v94 = vsel %vm17, %v46, 0
    %v97 = vsel %vm17, %v47, 0
    %99 = vmatprep.subr.mxu0 0.0
    %100 = vmatpush1.xpose.msra.mxu0 %v52
    %101 = vmatprep.subr.mxu0 0.0
    %102 = vmatpush1.xpose.msra.mxu0 %v55
    %103 = vmatprep.subr.mxu0 0.0
    %104 = vmatpush1.xpose.msra.mxu0 %v58
    %105 = vmatprep.subr.mxu0 0.0
    %106 = vmatpush1.xpose.msra.mxu0 %v61
    %107 = vmatprep.subr.mxu0 0.0
    %108 = vmatpush1.xpose.msra.mxu0 %v64
    %109 = vmatprep.subr.mxu0 0.0
    %110 = vmatpush1.xpose.msra.mxu0 %v67
    %111 = vmatprep.subr.mxu0 0.0
    %112 = vmatpush1.xpose.msra.mxu0 %v70
    %113 = vmatprep.subr.mxu0 0.0
    %114 = vmatpush1.xpose.msra.mxu0 %v73
    %115 = vmatprep.subr.mxu0 0.0
    %116 = vmatpush1.xpose.msra.mxu0 %v76
    %117 = vmatprep.subr.mxu0 0.0
    %118 = vmatpush1.xpose.msra.mxu0 %v79
    %119 = vmatprep.subr.mxu0 0.0
    %120 = vmatpush1.xpose.msra.mxu0 %v82
    %121 = vmatprep.subr.mxu0 0.0
    %122 = vmatpush1.xpose.msra.mxu0 %v85
    %123 = vmatprep.subr.mxu0 0.0
    %124 = vmatpush1.xpose.msra.mxu0 %v88
    %125 = vmatprep.subr.mxu0 0.0
    %126 = vmatpush1.xpose.msra.mxu0 %v91
    %127 = vmatprep.subr.mxu0 0.0
    %128 = vmatpush1.xpose.msra.mxu0 %v94
    %129 = vmatprep.subr.mxu0 0.0
    %130 = vmatpush1.xpose.msra.mxu0 %v97
    %131 = vmatprep.subr.mxu0 0.0
    %132 = vmatpush1.xpose.msra.mxu0 0.0
    %133 = vmatprep.subr.mxu0 0.0
    %134 = vmatpush1.xpose.msra.mxu0 0.0
    %135 = vmatprep.subr.mxu0 0.0
    %136 = vmatpush1.xpose.msra.mxu0 0.0
    %137 = vmatprep.subr.mxu0 0.0
    %138 = vmatpush1.xpose.msra.mxu0 0.0
    %139 = vmatprep.subr.mxu0 0.0
    %140 = vmatpush1.xpose.msra.mxu0 0.0
    %141 = vmatprep.subr.mxu0 0.0
    %142 = vmatpush1.xpose.msra.mxu0 0.0
    %143 = vmatprep.subr.mxu0 0.0
    %144 = vmatpush1.xpose.msra.mxu0 0.0
    %145 = vmatprep.subr.mxu0 0.0
    %146 = vmatpush1.xpose.msra.mxu0 0.0
    %147 = vmatprep.subr.mxu0 0.0
    %148 = vmatpush1.xpose.msra.mxu0 0.0
    %149 = vmatprep.subr.mxu0 0.0
    %150 = vmatpush1.xpose.msra.mxu0 0.0
    %151 = vmatprep.subr.mxu0 0.0
    %152 = vmatpush1.xpose.msra.mxu0 0.0
    %153 = vmatprep.subr.mxu0 0.0
    %154 = vmatpush1.xpose.msra.mxu0 0.0
    %155 = vmatprep.subr.mxu0 0.0
    %156 = vmatpush1.xpose.msra.mxu0 0.0
    %157 = vmatprep.subr.mxu0 0.0
    %158 = vmatpush1.xpose.msra.mxu0 0.0
    %159 = vmatprep.subr.mxu0 0.0
    %160 = vmatpush1.xpose.msra.mxu0 0.0
    %161 = vmatprep.subr.mxu0 0.0
    %162 = vmatpush1.xpose.msra.mxu0 0.0
    %163 = vmatprep.mubr.f32.mxu0 0.0
    %164 = vmatmul.mubr.f32.gmra.mrb[0].mxu0 %v49
    %v165 = vpop.f32.mrb[0].mxu0
    %v166 = vadd.f32 0.0, %v165
    %v167 = vpop.f32.mrb[0].mxu0
    %168 = vdwg.mxu0
    %v169 = vld [vmem:[%s2] sm:$0xff]
    %171 = vset.pattern.permute.xlu0 0
    %172 = vperm.xlu0 %171, %v169
    %v173 = vpop.permute.xlu0 %172
    %v175 = vmul.f32 %v166, %v173
    %v176 = vmax.f32 %v175, -50.0
    %v177 = vmin.f32 %v176, 50.0
    %v178 = vmin.f32 %v177, 20.0
    %v179 = vmul.f32 %v178, 1.442695
    %v180 = vpow.pop %v179
    %v181 = vadd.f32 %v180, 1.0
    %v182 = vlog2.pop %v181
    %v183 = vmul.f32 %v182, 0.6931472
    %v184 = vmul.f32 -0.5, %v180
    %v185 = vadd.f32 %v184, 1.0
    %v186 = vmul.f32 %v185, %v180
    %v187 = vand.u32 2147483647, %v180
    %vm188 = vcmp.lt.f32.partialorder %v187, 0.0004427343
    %v189 = vsel %vm188, %v186, %v183
    %vm190 = vcmp.gt.f32.partialorder %v177, 20.0
    %v191 = vsel %vm190, %v177, %v189
    %192 = vst [vmem:[#allocation2] sm:$0xff] %v191
    // Predicated region
    $region14: #{tpu_custom_call.1} parent=1 // pred_check
      _
    $region15: #{tpu_custom_call.1} parent=1 // pred_check_branch
      %194 = sbr.rel (0) target = $region17
    $region16: #{tpu_custom_call.1} parent=1 // pred_region
      %s196 = ssub.s32 128, 128
      %197 = vsyncadd [#allocation3], %s196
      %s199 = sshll.u32 [#allocation2], 4
      %s200 = int_to_ptr.vmem [resolvable:$true] %s199
      %202 = dma.vmem_to_hbm [thread:$0]  %s200, 128, %s3, [#allocation3]
    $region17: #{tpu_custom_call.1} parent=1 // pred_fallthru
      _
    // Predicated region
    $region18: #{tpu_custom_call.1} parent=1 // pred_check
      _
    $region19: #{tpu_custom_call.1} parent=1 // pred_check_branch
      %204 = sbr.rel (0) target = $region21
    $region20: #{tpu_custom_call.1} parent=1 // pred_region
      %205 = dma.done [#allocation3], 128
    $region21: #{tpu_custom_call.1} parent=1 // pred_fallthru
      _
    %206 = vsyncpa [#allocation3], 1

</llo_original>
